<compile_context>
chip_gen: v7x
topology: tpu7x:2x2x1
jax: 0.10.0
libtpu: 0.0.40
codegen_flags: <defaults>
</compile_context>

<pallas_src>
import math
import functools

import jax
import jax.numpy as jnp
from jax import lax
from jax.experimental import pallas as pl
from jax.experimental.pallas import tpu as pltpu


# ----------------------------- helpers -----------------------------

def _pick_tile(m, target, min_steps=1):
    """Largest multiple-of-8 tile <= target that evenly divides m, preferring
    >= min_steps grid steps when possible.  Falls back to the full extent."""
    if m % 8 != 0:
        return m
    cap = min(m, target)
    if min_steps > 1:
        steps = min_steps
        while steps > 1 and m // steps < 8:
            steps //= 2
        if steps > 1:
            cap = min(cap, m // steps)
    cap -= cap % 8
    tm = max(cap, 8)
    while tm >= 8:
        if m % tm == 0:
            return tm
        tm -= 8
    return m


def _exp_dtype_for_device():
    """bf16 exp on chips with a bf16 EUP (v6e/v7x); f32 on older generations."""
    try:
        kind = jax.devices()[0].device_kind.lower()
    except Exception:
        return jnp.float32
    for old in ("v2", "v3", "v4", "v5"):
        if old in kind:
            return jnp.float32
    return jnp.bfloat16


def _head_group(num_heads, head_dim):
    """Smallest head-group size G dividing num_heads with G*head_dim a
    multiple of 128 lanes; falls back to all heads (full H slab)."""
    for g in range(1, num_heads + 1):
        if num_heads % g == 0 and (g * head_dim) % 128 == 0:
            return g
    return num_heads


# ----------------------------- fused QKV projection -----------------------------

def qkv_kernel(x_ref, w_ref, b_ref, q_ref, k_ref, v_ref, *, hidden, compute_dtype):
    x = x_ref[...].astype(compute_dtype)            # [tm, H]  bf16 operand
    w = w_ref[...]                                  # [H, 3H]  already compute_dtype
    # one wide matmul (N = 3H) keeps the MXU weight-stationary; f32 accumulate
    y = jnp.dot(x, w, preferred_element_type=jnp.float32) + b_ref[...]   # [tm, 3H]
    q_ref[...] = y[:, 0 * hidden:1 * hidden].astype(q_ref.dtype)
    k_ref[...] = y[:, 1 * hidden:2 * hidden].astype(k_ref.dtype)
    v_ref[...] = y[:, 2 * hidden:3 * hidden].astype(v_ref.dtype)


def qkv_projection(x2d, wqkv, bqkv, *, compute_dtype=jnp.bfloat16):
    """x2d: [M, H] f32; wqkv: [H, 3H] compute_dtype; bqkv: [1, 3H] f32.
    Returns (q, k, v) each [M, H] in compute_dtype."""
    M, H = x2d.shape
    # cap the row tile so the 'parallel' grid has >=2 (ideally >=4) steps:
    # keeps both v7x TensorCores busy and the DMA/compute pipeline deep even
    # for small-batch inference shapes.
    tm = _pick_tile(M, target=512, min_steps=4)
    grid = (M // tm,)
    out_sds = jax.ShapeDtypeStruct((M, H), compute_dtype)
    row_spec = pl.BlockSpec((tm, H), lambda i: (i, 0))
    kern = functools.partial(qkv_kernel, hidden=H, compute_dtype=compute_dtype)

    def build(single_buffer_weights):
        # The fused weight/bias have a constant index_map (VMEM-resident);
        # single-buffer them when the jax version supports pipeline_mode so
        # they are not pointlessly double-buffered (saves ~6 MiB at H=1024,
        # relevant for v7x's 64 MiB physical VMEM).
        wkw = {"pipeline_mode": pl.Buffered(1)} if single_buffer_weights else {}
        in_specs = [pl.BlockSpec((tm, H), lambda i: (i, 0)),           # streamed x
                    pl.BlockSpec((H, 3 * H), lambda i: (0, 0), **wkw),  # resident W
                    pl.BlockSpec((1, 3 * H), lambda i: (0, 0), **wkw)]  # resident b
        return pl.pallas_call(
            kern, grid=grid, in_specs=in_specs,
            out_specs=(row_spec, row_spec, row_spec),
            out_shape=(out_sds, out_sds, out_sds),
            compiler_params=pltpu.CompilerParams(
                dimension_semantics=("parallel",),
                # explicit scoped-VMEM limit: v5e defaults to 16 MiB which is
                # too small for the 512-row tile at H>=768; 64 MiB is still
                # within every generation's physical VMEM.
                vmem_limit_bytes=64 * 1024 * 1024))

    try:
        return build(True)(x2d, wqkv, bqkv)
    except Exception:
        # pipeline_mode=pl.Buffered(1) unsupported on this jax/backend:
        # fall back to default double-buffering of the resident weight.
        return build(False)(x2d, wqkv, bqkv)


# ------------------------- scaled dot-product attention -------------------------

def attn_kernel(q_ref, k_ref, v_ref, mask_ref, ctx_ref, *probs_refs,
                heads_per_group, head_dim, scale, compute_dtype, exp_dtype):
    probs_ref = probs_refs[0] if probs_refs else None
    m = mask_ref[0]                                   # [1, S] additive mask (f32)
    d = head_dim

    for h in range(heads_per_group):                  # static unroll over <= a few heads
        cols = slice(h * d, (h + 1) * d)
        # apply 1/sqrt(d) to the small [tq, d] q slice, not the [tq, S] scores
        q_h = (q_ref[0, :, cols].astype(jnp.float32) * scale).astype(compute_dtype)
        k_h = k_ref[0, :, cols].astype(compute_dtype)
        v_h = v_ref[0, :, cols].astype(compute_dtype)

        # Q @ K^T without materializing a transpose of K (contract dim d of both)
        scores = lax.dot_general(q_h, k_h, (((1,), (1,)), ((), ())),
                                 preferred_element_type=jnp.float32)     # [tq, S]
        scores = scores + m                            # mask broadcasts over rows
        scores = scores - jnp.max(scores, axis=-1, keepdims=True)
        # bf16 exp on v6e/v7x (bf16 EUP ~2x throughput); f32 elsewhere.
        e = jnp.exp(scores.astype(exp_dtype)).astype(jnp.float32)
        inv = pl.reciprocal(jnp.sum(e, axis=-1, keepdims=True), approx=False)
        probs = e * inv                                # softmax(dim=-1), f32
        # dropout(attention_probs) == identity in eval mode.

        if probs_ref is not None:
            probs_ref[0, h] = probs.astype(probs_ref.dtype)
        # write this head's context straight into its columns of the ctx block
        # (no NH-way concatenate); the block is stored lane-dense once per step.
        ctx_ref[0, :, cols] = jnp.dot(probs.astype(compute_dtype), v_h,
                                      preferred_element_type=jnp.float32
                                      ).astype(ctx_ref.dtype)


def attention(q, k, v, mask, num_heads, head_dim, *,
              compute_dtype=jnp.bfloat16, probs_dtype=jnp.bfloat16,
              exp_dtype=None, return_probs=True):
    """q/k/v: [B, S, H] head-interleaved (compute_dtype); mask: [B, 1, S] additive."""
    B, S, H = q.shape
    scale = 1.0 / math.sqrt(head_dim)
    if exp_dtype is None:
        exp_dtype = _exp_dtype_for_device()

    G = _head_group(num_heads, head_dim)      # heads per 128-lane-aligned slab
    num_groups = num_heads // G
    gw = G * head_dim                         # slab lane width (mult of 128 or == H)
    tq = _pick_tile(S, target=256)            # query-row tile bounds [tq,S] scratch
    grid = (B, num_groups, S // tq)           # (b, head-group, query-tile)

    q_spec = pl.BlockSpec((1, tq, gw), lambda b, hg, qi: (b, qi, hg))
    kv_spec = pl.BlockSpec((1, S, gw), lambda b, hg, qi: (b, 0, hg))   # const in qi
    mask_spec = pl.BlockSpec((1, 1, S), lambda b, hg, qi: (b, 0, 0))
    ctx_spec = pl.BlockSpec((1, tq, gw), lambda b, hg, qi: (b, qi, hg))

    out_specs = [ctx_spec]
    out_shape = [jax.ShapeDtypeStruct((B, S, H), jnp.float32)]
    if return_probs:
        out_specs.append(pl.BlockSpec((1, G, tq, S),
                                      lambda b, hg, qi: (b, hg, qi, 0)))
        out_shape.append(jax.ShapeDtypeStruct((B, num_heads, S, S), probs_dtype))

    outs = pl.pallas_call(
        functools.partial(attn_kernel, heads_per_group=G, head_dim=head_dim,
                          scale=scale, compute_dtype=compute_dtype,
                          exp_dtype=exp_dtype),
        grid=grid,
        in_specs=[q_spec, kv_spec, kv_spec, mask_spec],
        out_specs=tuple(out_specs),
        out_shape=tuple(out_shape),
        compiler_params=pltpu.CompilerParams(
            # every output block is written by exactly one grid step
            dimension_semantics=("parallel", "parallel", "parallel"),
            vmem_limit_bytes=64 * 1024 * 1024),
    )(q, k, v, mask)

    if return_probs:
        return outs[0], outs[1]
    return outs[0], None


# --------------------------------- full module ----------------------------------

def prepare_qkv_params(params, compute_dtype=jnp.bfloat16):
    """One-time weight prep: fuse [Wq|Wk|Wv]^T -> [H, 3H] (compute_dtype) and
    [bq|bk|bv] -> [1, 3H] (f32).  Cache the result across forwards."""
    wqkv = jnp.concatenate([params["wq"].T, params["wk"].T, params["wv"].T],
                           axis=1).astype(compute_dtype)
    bqkv = jnp.concatenate([params["bq"], params["bk"], params["bv"]]
                           )[None, :].astype(jnp.float32)
    return wqkv, bqkv


def bert_self_attention(hidden_states, attention_mask, params, num_heads, head_dim,
                        *, compute_dtype=jnp.bfloat16, probs_dtype=jnp.bfloat16,
                        return_probs=True, fused_qkv_params=None):
    B, S, H = hidden_states.shape
    if fused_qkv_params is None:
        fused_qkv_params = prepare_qkv_params(params, compute_dtype)
    wqkv, bqkv = fused_qkv_params

    x2d = hidden_states.reshape(B * S, H)
    q2d, k2d, v2d = qkv_projection(x2d, wqkv, bqkv, compute_dtype=compute_dtype)

    # [B*S, H] -> [B, S, H]; heads remain interleaved column blocks, so no
    # [B, NH, S, D] transposes ever touch HBM (pure metadata reshapes only).
    q = q2d.reshape(B, S, H)
    k = k2d.reshape(B, S, H)
    v = v2d.reshape(B, S, H)
    mask = attention_mask.reshape(B, 1, S)

    ctx, probs = attention(q, k, v, mask, num_heads, head_dim,
                           compute_dtype=compute_dtype, probs_dtype=probs_dtype,
                           return_probs=return_probs)
    # ctx is already [B, S, NH*D] with head h in columns [h*D, (h+1)*D), which
    # is exactly the module's permute(0, 2, 1, 3).view(..., all_head_size).
    return ctx, probs


if __name__ == "__main__":
    # config: hidden=32, heads=4, head_dim=8; batch=2, seq=8
    B, S, H, NH = 2, 8, 32, 4
    D = H // NH

    key = jax.random.PRNGKey(0)
    ks = jax.random.split(key, 8)
    params = {
        "wq": jax.random.normal(ks[0], (H, H), jnp.float32) * 0.02,
        "wk": jax.random.normal(ks[1], (H, H), jnp.float32) * 0.02,
        "wv": jax.random.normal(ks[2], (H, H), jnp.float32) * 0.02,
        "bq": jax.random.normal(ks[3], (H,), jnp.float32) * 0.02,
        "bk": jax.random.normal(ks[4], (H,), jnp.float32) * 0.02,
        "bv": jax.random.normal(ks[5], (H,), jnp.float32) * 0.02,
    }

    hidden_states = jax.random.normal(ks[6], (B, S, H), jnp.float32)
    # additive BERT mask: (1 - valid) * -10000, shape [B, 1, 1, S]
    valid = (jax.random.uniform(ks[7], (B, 1, 1, S)) > 0.2).astype(jnp.float32)
    attention_mask = (1.0 - valid) * -10000.0

    # hoisted one-time weight fusion (perf item: do not pay it every forward)
    fused = prepare_qkv_params(params)

    ctx, probs = bert_self_attention(hidden_states, attention_mask, params, NH, D,
                                     fused_qkv_params=fused)
    jax.block_until_ready((ctx, probs))

    # f32 reference (exact module semantics). Kernel matmuls run in bf16 with
    # f32 accumulation and probs are returned in bf16, so compare with a
    # matching tolerance.
    def ref():
        x2d = hidden_states.reshape(B * S, H)
        q = (x2d @ params["wq"].T + params["bq"]).reshape(B, S, NH, D).transpose(0, 2, 1, 3)
        k = (x2d @ params["wk"].T + params["bk"]).reshape(B, S, NH, D).transpose(0, 2, 1, 3)
        v = (x2d @ params["wv"].T + params["bv"]).reshape(B, S, NH, D).transpose(0, 2, 1, 3)
        s = jnp.einsum("bhqd,bhkd->bhqk", q, k) / math.sqrt(D) + attention_mask
        p = jax.nn.softmax(s, axis=-1)
        c = jnp.einsum("bhqk,bhkd->bhqd", p, v).transpose(0, 2, 1, 3).reshape(B, S, H)
        return c, p

    rc, rp = ref()
    assert ctx.shape == (B, S, H) and probs.shape == (B, NH, S, S)
    assert jnp.allclose(ctx, rc, atol=1e-2), (
        f"context mismatch: max abs diff {jnp.max(jnp.abs(ctx - rc))}")
    assert jnp.allclose(probs.astype(jnp.float32), rp, atol=1e-2), (
        f"probs mismatch: max abs diff {jnp.max(jnp.abs(probs.astype(jnp.float32) - rp))}")
    print("KERNEL_OK")
</pallas_src>

<mosaic_0001>
module attributes {stable_mosaic.version = 11 : i64} {
  func.func @qkv_kernel(%arg0: i32, %arg1: memref<8x32xf32, #tpu.memory_space<vmem>>, %arg2: memref<32x96xbf16, #tpu.memory_space<vmem>>, %arg3: memref<1x96xf32, #tpu.memory_space<vmem>>, %arg4: memref<8x32xbf16, #tpu.memory_space<vmem>>, %arg5: memref<8x32xbf16, #tpu.memory_space<vmem>>, %arg6: memref<8x32xbf16, #tpu.memory_space<vmem>>) attributes {dimension_semantics = [#tpu.dimension_semantics<parallel>], iteration_bounds = array<i64: 2>, scalar_prefetch = 0 : i64, scratch_operands = 0 : i64, tpu.core_type = #tpu.core_type<tc>, window_params = [{transform_indices = @transform_0, window_bounds = array<i64: 8, 32>}, {pipeline_mode = #tpu.pipeline_mode<synchronous>, transform_indices = @transform_1, window_bounds = array<i64: 32, 96>}, {pipeline_mode = #tpu.pipeline_mode<synchronous>, transform_indices = @transform_2, window_bounds = array<i64: 1, 96>}, {transform_indices = @transform_3, window_bounds = array<i64: 8, 32>}, {transform_indices = @transform_4, window_bounds = array<i64: 8, 32>}, {transform_indices = @transform_5, window_bounds = array<i64: 8, 32>}]} {
    %c0 = arith.constant 0 : index
    %c0_0 = arith.constant 0 : index
    %0 = vector.load %arg1[%c0, %c0_0] : memref<8x32xf32, #tpu.memory_space<vmem>>, vector<8x32xf32>
    %1 = arith.truncf %0 : vector<8x32xf32> to vector<8x32xbf16>
    %c0_1 = arith.constant 0 : index
    %c0_2 = arith.constant 0 : index
    %2 = vector.load %arg2[%c0_1, %c0_2] : memref<32x96xbf16, #tpu.memory_space<vmem>>, vector<32x96xbf16>
    %cst = arith.constant dense<0.000000e+00> : vector<8x96xf32>
    %3 = tpu.matmul %1, %2, %cst {dimension_numbers = #tpu.dot_dimension_numbers<[1], [0], [0], [1], [0, 0, 1, 1], [], []>} : vector<8x32xbf16>, vector<32x96xbf16>, vector<8x96xf32> -> vector<8x96xf32>
    %c0_3 = arith.constant 0 : index
    %c0_4 = arith.constant 0 : index
    %4 = vector.load %arg3[%c0_3, %c0_4] : memref<1x96xf32, #tpu.memory_space<vmem>>, vector<1x96xf32>
    %5 = vector.broadcast %4 : vector<1x96xf32> to vector<8x96xf32>
    %6 = arith.addf %3, %5 : vector<8x96xf32>
    %7 = vector.extract_strided_slice %6 {offsets = [0, 0], sizes = [8, 32], strides = [1, 1]} : vector<8x96xf32> to vector<8x32xf32>
    %8 = arith.truncf %7 : vector<8x32xf32> to vector<8x32xbf16>
    %c0_5 = arith.constant 0 : index
    %c0_6 = arith.constant 0 : index
    %9 = vector.load %arg4[%c0_5, %c0_6] : memref<8x32xbf16, #tpu.memory_space<vmem>>, vector<8x32xbf16>
    tpu.vector_store %arg4[%c0_5, %c0_6], %8 {strides = array<i32>} : memref<8x32xbf16, #tpu.memory_space<vmem>>, vector<8x32xbf16>,
    %10 = vector.extract_strided_slice %6 {offsets = [0, 32], sizes = [8, 32], strides = [1, 1]} : vector<8x96xf32> to vector<8x32xf32>
    %11 = arith.truncf %10 : vector<8x32xf32> to vector<8x32xbf16>
    %c0_7 = arith.constant 0 : index
    %c0_8 = arith.constant 0 : index
    %12 = vector.load %arg5[%c0_7, %c0_8] : memref<8x32xbf16, #tpu.memory_space<vmem>>, vector<8x32xbf16>
    tpu.vector_store %arg5[%c0_7, %c0_8], %11 {strides = array<i32>} : memref<8x32xbf16, #tpu.memory_space<vmem>>, vector<8x32xbf16>,
    %13 = vector.extract_strided_slice %6 {offsets = [0, 64], sizes = [8, 32], strides = [1, 1]} : vector<8x96xf32> to vector<8x32xf32>
    %14 = arith.truncf %13 : vector<8x32xf32> to vector<8x32xbf16>
    %c0_9 = arith.constant 0 : index
    %c0_10 = arith.constant 0 : index
    %15 = vector.load %arg6[%c0_9, %c0_10] : memref<8x32xbf16, #tpu.memory_space<vmem>>, vector<8x32xbf16>
    tpu.vector_store %arg6[%c0_9, %c0_10], %14 {strides = array<i32>} : memref<8x32xbf16, #tpu.memory_space<vmem>>, vector<8x32xbf16>,
    return
  }
  func.func @transform_0(%arg0: i32) -> (i32, i32) {
    %c0_i32 = arith.constant 0 : i32
    %c0_i32_0 = arith.constant 0 : i32
    return %arg0, %c0_i32 : i32, i32
  }
  func.func @transform_1(%arg0: i32) -> (i32, i32) {
    %c0_i32 = arith.constant 0 : i32
    %c0_i32_0 = arith.constant 0 : i32
    %c0_i32_1 = arith.constant 0 : i32
    return %c0_i32, %c0_i32_0 : i32, i32
  }
  func.func @transform_2(%arg0: i32) -> (i32, i32) {
    %c0_i32 = arith.constant 0 : i32
    %c0_i32_0 = arith.constant 0 : i32
    %c0_i32_1 = arith.constant 0 : i32
    return %c0_i32, %c0_i32_0 : i32, i32
  }
  func.func @transform_3(%arg0: i32) -> (i32, i32) {
    %c0_i32 = arith.constant 0 : i32
    %c0_i32_0 = arith.constant 0 : i32
    return %arg0, %c0_i32 : i32, i32
  }
  func.func @transform_4(%arg0: i32) -> (i32, i32) {
    %c0_i32 = arith.constant 0 : i32
    %c0_i32_0 = arith.constant 0 : i32
    return %arg0, %c0_i32 : i32, i32
  }
  func.func @transform_5(%arg0: i32) -> (i32, i32) {
    %c0_i32 = arith.constant 0 : i32
    %c0_i32_0 = arith.constant 0 : i32
    return %arg0, %c0_i32 : i32, i32
  }
}

module attributes {stable_mosaic.version = 11 : i64} {
  func.func @qkv_kernel(%arg0: i32, %arg1: memref<8x32xf32, #tpu.memory_space<vmem>>, %arg2: memref<32x96xbf16, #tpu.memory_space<vmem>>, %arg3: memref<1x96xf32, #tpu.memory_space<vmem>>, %arg4: memref<8x32xbf16, #tpu.memory_space<vmem>>, %arg5: memref<8x32xbf16, #tpu.memory_space<vmem>>, %arg6: memref<8x32xbf16, #tpu.memory_space<vmem>>) attributes {dimension_semantics = [#tpu.dimension_semantics<parallel>], iteration_bounds = array<i64: 2>, scalar_prefetch = 0 : i64, scratch_operands = 0 : i64, tpu.core_type = #tpu.core_type<tc>, window_params = [{transform_indices = @transform_0, window_bounds = array<i64: 8, 32>}, {pipeline_mode = #tpu.pipeline_mode<synchronous>, transform_indices = @transform_1, window_bounds = array<i64: 32, 96>}, {pipeline_mode = #tpu.pipeline_mode<synchronous>, transform_indices = @transform_2, window_bounds = array<i64: 1, 96>}, {transform_indices = @transform_3, window_bounds = array<i64: 8, 32>}, {transform_indices = @transform_4, window_bounds = array<i64: 8, 32>}, {transform_indices = @transform_5, window_bounds = array<i64: 8, 32>}]} {
    %c0 = arith.constant 0 : index
    %c0_0 = arith.constant 0 : index
    %0 = vector.load %arg1[%c0, %c0_0] : memref<8x32xf32, #tpu.memory_space<vmem>>, vector<8x32xf32>
    %1 = arith.truncf %0 : vector<8x32xf32> to vector<8x32xbf16>
    %c0_1 = arith.constant 0 : index
    %c0_2 = arith.constant 0 : index
    %2 = vector.load %arg2[%c0_1, %c0_2] : memref<32x96xbf16, #tpu.memory_space<vmem>>, vector<32x96xbf16>
    %cst = arith.constant dense<0.000000e+00> : vector<8x96xf32>
    %3 = tpu.matmul %1, %2, %cst {dimension_numbers = #tpu.dot_dimension_numbers<[1], [0], [0], [1], [0, 0, 1, 1], [], []>} : vector<8x32xbf16>, vector<32x96xbf16>, vector<8x96xf32> -> vector<8x96xf32>
    %c0_3 = arith.constant 0 : index
    %c0_4 = arith.constant 0 : index
    %4 = vector.load %arg3[%c0_3, %c0_4] : memref<1x96xf32, #tpu.memory_space<vmem>>, vector<1x96xf32>
    %5 = vector.broadcast %4 : vector<1x96xf32> to vector<8x96xf32>
    %6 = arith.addf %3, %5 : vector<8x96xf32>
    %7 = vector.extract_strided_slice %6 {offsets = [0, 0], sizes = [8, 32], strides = [1, 1]} : vector<8x96xf32> to vector<8x32xf32>
    %8 = arith.truncf %7 : vector<8x32xf32> to vector<8x32xbf16>
    %c0_5 = arith.constant 0 : index
    %c0_6 = arith.constant 0 : index
    %9 = vector.load %arg4[%c0_5, %c0_6] : memref<8x32xbf16, #tpu.memory_space<vmem>>, vector<8x32xbf16>
    tpu.vector_store %arg4[%c0_5, %c0_6], %8 {strides = array<i32>} : memref<8x32xbf16, #tpu.memory_space<vmem>>, vector<8x32xbf16>,
    %10 = vector.extract_strided_slice %6 {offsets = [0, 32], sizes = [8, 32], strides = [1, 1]} : vector<8x96xf32> to vector<8x32xf32>
    %11 = arith.truncf %10 : vector<8x32xf32> to vector<8x32xbf16>
    %c0_7 = arith.constant 0 : index
    %c0_8 = arith.constant 0 : index
    %12 = vector.load %arg5[%c0_7, %c0_8] : memref<8x32xbf16, #tpu.memory_space<vmem>>, vector<8x32xbf16>
    tpu.vector_store %arg5[%c0_7, %c0_8], %11 {strides = array<i32>} : memref<8x32xbf16, #tpu.memory_space<vmem>>, vector<8x32xbf16>,
    %13 = vector.extract_strided_slice %6 {offsets = [0, 64], sizes = [8, 32], strides = [1, 1]} : vector<8x96xf32> to vector<8x32xf32>
    %14 = arith.truncf %13 : vector<8x32xf32> to vector<8x32xbf16>
    %c0_9 = arith.constant 0 : index
    %c0_10 = arith.constant 0 : index
    %15 = vector.load %arg6[%c0_9, %c0_10] : memref<8x32xbf16, #tpu.memory_space<vmem>>, vector<8x32xbf16>
    tpu.vector_store %arg6[%c0_9, %c0_10], %14 {strides = array<i32>} : memref<8x32xbf16, #tpu.memory_space<vmem>>, vector<8x32xbf16>,
    return
  }
  func.func @transform_0(%arg0: i32) -> (i32, i32) {
    %c0_i32 = arith.constant 0 : i32
    %c0_i32_0 = arith.constant 0 : i32
    return %arg0, %c0_i32 : i32, i32
  }
  func.func @transform_1(%arg0: i32) -> (i32, i32) {
    %c0_i32 = arith.constant 0 : i32
    %c0_i32_0 = arith.constant 0 : i32
    %c0_i32_1 = arith.constant 0 : i32
    return %c0_i32, %c0_i32_0 : i32, i32
  }
  func.func @transform_2(%arg0: i32) -> (i32, i32) {
    %c0_i32 = arith.constant 0 : i32
    %c0_i32_0 = arith.constant 0 : i32
    %c0_i32_1 = arith.constant 0 : i32
    return %c0_i32, %c0_i32_0 : i32, i32
  }
  func.func @transform_3(%arg0: i32) -> (i32, i32) {
    %c0_i32 = arith.constant 0 : i32
    %c0_i32_0 = arith.constant 0 : i32
    return %arg0, %c0_i32 : i32, i32
  }
  func.func @transform_4(%arg0: i32) -> (i32, i32) {
    %c0_i32 = arith.constant 0 : i32
    %c0_i32_0 = arith.constant 0 : i32
    return %arg0, %c0_i32 : i32, i32
  }
  func.func @transform_5(%arg0: i32) -> (i32, i32) {
    %c0_i32 = arith.constant 0 : i32
    %c0_i32_0 = arith.constant 0 : i32
    return %arg0, %c0_i32 : i32, i32
  }
}

</mosaic_0001>

<llo_original>
// kernel: tpu_custom_call.1
$region0: #{tpu_custom_call.1}
  #allocation0 [shape = 'u32[]', space=smem, size = 0x4, offset = 0x4, fixed_abs, tag = 'smem constant byte address 0x4 - core index']
  #allocation1 [shape = 'u32[144,128]{1,0:T(1,128)}', space=vmem, size = 0x12000, scoped, tag = 'internal scratch']
  %s0 = inlined_call_operand.hbm [shape: f32[16,32], index: 0, kind: input, shape index: {}]
  %s1 = inlined_call_operand.hbm [shape: bf16[32,96], index: 1, kind: input, shape index: {}]
  %s2 = inlined_call_operand.hbm [shape: f32[1,96], index: 2, kind: input, shape index: {}]
  %s3 = inlined_call_operand.hbm [shape: bf16[16,32], index: 3, kind: output, shape index: {0}]
  %s4 = inlined_call_operand.hbm [shape: bf16[16,32], index: 4, kind: output, shape index: {1}]
  %s5 = inlined_call_operand.hbm [shape: bf16[16,32], index: 5, kind: output, shape index: {2}]
  %6 = xla_tuple %s3, %s4, %s5
  %s7 = sld [smem:[#allocation0]]
  $region73: #{tpu_custom_call.1} parent=0
    _
  %s9 = ssub.s32 1, %s7
  %s10 = scalar_select 0, %s9, %s7
  $region1: #{tpu_custom_call.1} parent=0
    #allocation2 [shape = 'u8[8192]{0}', space=vmem, size = 0x2000, scoped, tag = 'input window, operand 0']
    #allocation3 [shape = 's32[2]{0}', space=sflag, size = 0x8, scoped, tag = 'scoped memory for tpu_custom_call.1']
    #allocation4 [shape = 's32[2]{0}', space=sflag, size = 0x8, scoped, tag = 'scoped memory for tpu_custom_call.1']
    #allocation5 [shape = 'u8[8192]{0}', space=vmem, size = 0x2000, scoped, tag = 'input window, operand 1, single buffered']
    #allocation6 [shape = 's32[1]{0}', space=sflag, size = 0x4, scoped, tag = 'scoped memory for tpu_custom_call.1']
    #allocation7 [shape = 'u8[512]{0}', space=vmem, size = 0x400, scoped, tag = 'input window, operand 2, single buffered']
    #allocation8 [shape = 'u8[4096]{0}', space=vmem, size = 0x1000, scoped, tag = 'output window, operand 0']
    #allocation9 [shape = 'u8[4096]{0}', space=vmem, size = 0x1000, scoped, tag = 'output window, operand 1']
    #allocation10 [shape = 's32[2]{0}', space=sflag, size = 0x8, scoped, tag = 'scoped memory for tpu_custom_call.1']
    #allocation11 [shape = 'u8[4096]{0}', space=vmem, size = 0x1000, scoped, tag = 'output window, operand 2']
    %11 = vsyncpa [#allocation3], 0
    %s12 = scalar_lea.sflag [#allocation3], 1
    %13 = vsyncpa %s12, 0
    %14 = vsyncpa [#allocation6], 0
    %15 = vsyncpa [#allocation4], 0
    %s16 = scalar_lea.sflag [#allocation4], 1
    %17 = vsyncpa %s16, 0
    %18 = vsyncpa [#allocation10], 0
    %s19 = scalar_lea.sflag [#allocation10], 1
    %20 = vsyncpa %s19, 0
    loop: start=0, step=1, limit=4
    $region2: #{tpu_custom_call.1} parent=1 // loop_pre_header
      _
    $region3: #{tpu_custom_call.1} parent=1 // loop_header
      %s22 = sphi 0, %s26
      %p23 = scmp.ge.s32.totalorder %s22, 4
      %s32 = sphi 0, %s34
      %s35 = sphi 0, %s32
      %s36 = sphi 0, %s35
      %s52 = sphi 0, %s36
      %s56 = sphi 0, %s56
      %s58 = sphi 0, %s56
      %s59 = sphi 0, %s58
      %s73 = sphi 0, %s59
      %s77 = sphi 0, %s77
      %s79 = sphi 0, %s77
      %s80 = sphi 0, %s79
      %s94 = sphi 0, %s80
      %s100 = sphi 0, %s102
      %s103 = sphi 0, %s100
      %s104 = sphi 0, %s103
      %s120 = sphi 0, %s104
      %s126 = sphi 0, %s128
      %s129 = sphi 0, %s126
      %s130 = sphi 0, %s129
      %s146 = sphi 0, %s130
      %s152 = sphi 0, %s154
      %s155 = sphi 0, %s152
      %s156 = sphi 0, %s155
      %s172 = sphi 0, %s156
    $region4: #{tpu_custom_call.1} parent=1 // loop_header_branch
      %25 = sbr.rel (%p23) target = $region8
    $region5: #{tpu_custom_call.1} parent=1 // loop_body
      %s27 = ssub.s32 %s22, 1
      %s28 = ssub.s32 %s22, 2
      %s29 = sadd.s32 %s22, 1
      %s30 = ssub.s32 %s22, %s29
      %p31 = scmp.eq.s32.totalorder %s30, 0
      %s33 = sadd.s32 %s32, 1
      %s34 = scalar_select %p31, %s32, %s33
      %p37 = pneg %p31
      %p38 = scmp.eq.s32.totalorder %s22, 1
      %p39 = por %p37, %p38
      %p40 = scmp.ne.s32.totalorder %s32, %s35
      %p41 = scmp.eq.s32.totalorder %s22, 0
      %p42 = por %p40, %p41
      %p43 = scmp.ne.s32.totalorder %s32, %s35
      %p44 = scmp.eq.s32.totalorder %s27, 1
      %p45 = por %p43, %p44
      %p46 = scmp.ne.s32.totalorder %s35, %s36
      %p47 = scmp.eq.s32.totalorder %s27, 0
      %p48 = por %p46, %p47
      %p49 = scmp.ne.s32.totalorder %s35, %s36
      %p50 = scmp.eq.s32.totalorder %s28, 1
      %p51 = por %p49, %p50
      %p53 = scmp.ne.s32.totalorder %s36, %s52
      %p54 = scmp.eq.s32.totalorder %s28, 0
      %p55 = por %p53, %p54
      %s57 = sadd.s32 %s56, 1
      %p60 = scmp.eq.s32.totalorder %s22, 1
      %p61 = scmp.ne.s32.totalorder %s56, %s58
      %p62 = scmp.eq.s32.totalorder %s22, 0
      %p63 = por %p61, %p62
      %p64 = scmp.ne.s32.totalorder %s56, %s58
      %p65 = scmp.eq.s32.totalorder %s27, 1
      %p66 = por %p64, %p65
      %p67 = scmp.ne.s32.totalorder %s58, %s59
      %p68 = scmp.eq.s32.totalorder %s27, 0
      %p69 = por %p67, %p68
      %p70 = scmp.ne.s32.totalorder %s58, %s59
      %p71 = scmp.eq.s32.totalorder %s28, 1
      %p72 = por %p70, %p71
      %p74 = scmp.ne.s32.totalorder %s59, %s73
      %p75 = scmp.eq.s32.totalorder %s28, 0
      %p76 = por %p74, %p75
      %s78 = sadd.s32 %s77, 1
      %p81 = scmp.eq.s32.totalorder %s22, 1
      %p82 = scmp.ne.s32.totalorder %s77, %s79
      %p83 = scmp.eq.s32.totalorder %s22, 0
      %p84 = por %p82, %p83
      %p85 = scmp.ne.s32.totalorder %s77, %s79
      %p86 = scmp.eq.s32.totalorder %s27, 1
      %p87 = por %p85, %p86
      %p88 = scmp.ne.s32.totalorder %s79, %s80
      %p89 = scmp.eq.s32.totalorder %s27, 0
      %p90 = por %p88, %p89
      %p91 = scmp.ne.s32.totalorder %s79, %s80
      %p92 = scmp.eq.s32.totalorder %s28, 1
      %p93 = por %p91, %p92
      %p95 = scmp.ne.s32.totalorder %s80, %s94
      %p96 = scmp.eq.s32.totalorder %s28, 0
      %p97 = por %p95, %p96
      %s98 = ssub.s32 %s22, %s29
      %p99 = scmp.eq.s32.totalorder %s98, 0
      %s101 = sadd.s32 %s100, 1
      %s102 = scalar_select %p99, %s100, %s101
      %p105 = pneg %p99
      %p106 = scmp.eq.s32.totalorder %s22, 1
      %p107 = por %p105, %p106
      %p108 = scmp.ne.s32.totalorder %s100, %s103
      %p109 = scmp.eq.s32.totalorder %s22, 0
      %p110 = por %p108, %p109
      %p111 = scmp.ne.s32.totalorder %s100, %s103
      %p112 = scmp.eq.s32.totalorder %s27, 1
      %p113 = por %p111, %p112
      %p114 = scmp.ne.s32.totalorder %s103, %s104
      %p115 = scmp.eq.s32.totalorder %s27, 0
      %p116 = por %p114, %p115
      %p117 = scmp.ne.s32.totalorder %s103, %s104
      %p118 = scmp.eq.s32.totalorder %s28, 1
      %p119 = por %p117, %p118
      %p121 = scmp.ne.s32.totalorder %s104, %s120
      %p122 = scmp.eq.s32.totalorder %s28, 0
      %p123 = por %p121, %p122
      %s124 = ssub.s32 %s22, %s29
      %p125 = scmp.eq.s32.totalorder %s124, 0
      %s127 = sadd.s32 %s126, 1
      %s128 = scalar_select %p125, %s126, %s127
      %p131 = pneg %p125
      %p132 = scmp.eq.s32.totalorder %s22, 1
      %p133 = por %p131, %p132
      %p134 = scmp.ne.s32.totalorder %s126, %s129
      %p135 = scmp.eq.s32.totalorder %s22, 0
      %p136 = por %p134, %p135
      %p137 = scmp.ne.s32.totalorder %s126, %s129
      %p138 = scmp.eq.s32.totalorder %s27, 1
      %p139 = por %p137, %p138
      %p140 = scmp.ne.s32.totalorder %s129, %s130
      %p141 = scmp.eq.s32.totalorder %s27, 0
      %p142 = por %p140, %p141
      %p143 = scmp.ne.s32.totalorder %s129, %s130
      %p144 = scmp.eq.s32.totalorder %s28, 1
      %p145 = por %p143, %p144
      %p147 = scmp.ne.s32.totalorder %s130, %s146
      %p148 = scmp.eq.s32.totalorder %s28, 0
      %p149 = por %p147, %p148
      %s150 = ssub.s32 %s22, %s29
      %p151 = scmp.eq.s32.totalorder %s150, 0
      %s153 = sadd.s32 %s152, 1
      %s154 = scalar_select %p151, %s152, %s153
      %p157 = pneg %p151
      %p158 = scmp.eq.s32.totalorder %s22, 1
      %p159 = por %p157, %p158
      %p160 = scmp.ne.s32.totalorder %s152, %s155
      %p161 = scmp.eq.s32.totalorder %s22, 0
      %p162 = por %p160, %p161
      %p163 = scmp.ne.s32.totalorder %s152, %s155
      %p164 = scmp.eq.s32.totalorder %s27, 1
      %p165 = por %p163, %p164
      %p166 = scmp.ne.s32.totalorder %s155, %s156
      %p167 = scmp.eq.s32.totalorder %s27, 0
      %p168 = por %p166, %p167
      %p169 = scmp.ne.s32.totalorder %s155, %s156
      %p170 = scmp.eq.s32.totalorder %s28, 1
      %p171 = por %p169, %p170
      %p173 = scmp.ne.s32.totalorder %s156, %s172
      %p174 = scmp.eq.s32.totalorder %s28, 0
      %p175 = por %p173, %p174
      %p176 = scmp.le.s32.totalorder 1, %s22
      %p177 = scmp.lt.s32.totalorder %s22, 3
      %p178 = pnand %p176, %p177
      %p179 = pneg %p178
      // Predicated region
      $region9: #{tpu_custom_call.1} parent=5 // pred_check
        _
      $region10: #{tpu_custom_call.1} parent=5 // pred_check_branch
        %181 = sbr.rel (%p178) target = $region12
      $region11: #{tpu_custom_call.1} parent=5 // pred_region
        %s182 = ssub.s32 %s22, 1
        // Predicated region
        $region13: #{tpu_custom_call.1} parent=11 // pred_check
          %p183 = pneg %p69
        $region14: #{tpu_custom_call.1} parent=11 // pred_check_branch
          %185 = sbr.rel (%p183) target = $region16
        $region15: #{tpu_custom_call.1} parent=11 // pred_region
          %s187 = ssub.s32 256, 256
          %188 = vsyncadd [#allocation6], %s187
          %s189 = sshll.u32 [#allocation5], 4
          %s190 = int_to_ptr.vmem [resolvable:$true] %s189
          %195 = dma.hbm_to_vmem [thread:$0]  %s1, 256, %s190, [#allocation6], 64, 64, 4
        $region16: #{tpu_custom_call.1} parent=11 // pred_fallthru
          _
        // Predicated region
        $region17: #{tpu_custom_call.1} parent=11 // pred_check
          %p196 = pneg %p90
        $region18: #{tpu_custom_call.1} parent=11 // pred_check_branch
          %198 = sbr.rel (%p196) target = $region20
        $region19: #{tpu_custom_call.1} parent=11 // pred_region
          %s200 = ssub.s32 16, 16
          %201 = vsyncadd [#allocation6], %s200
          %s203 = sshll.u32 [#allocation7], 4
          %s204 = int_to_ptr.vmem [resolvable:$true] %s203
          %206 = dma.hbm_to_vmem [thread:$0]  %s2, 16, %s204, [#allocation6]
        $region20: #{tpu_custom_call.1} parent=11 // pred_fallthru
          _
      $region12: #{tpu_custom_call.1} parent=5 // pred_fallthru
        _
      %p207 = scmp.lt.s32.totalorder %s22, 2
      // Predicated region
      $region21: #{tpu_custom_call.1} parent=5 // pred_check
        %p208 = pneg %p207
      $region22: #{tpu_custom_call.1} parent=5 // pred_check_branch
        %210 = sbr.rel (%p208) target = $region24
      $region23: #{tpu_custom_call.1} parent=5 // pred_region
        // Predicated region
        $region25: #{tpu_custom_call.1} parent=23 // pred_check
          %p211 = pneg %p42
        $region26: #{tpu_custom_call.1} parent=23 // pred_check_branch
          %213 = sbr.rel (%p211) target = $region28
        $region27: #{tpu_custom_call.1} parent=23 // pred_region
          %s214 = sand.u32 %s32, 1
          %s215 = scalar_lea.sflag [#allocation3], %s214
          %s216 = sand.u32 %s32, 1
          %s217 = smul.addr %s216, 8
          %s218 = scalar_lea.vmem [#allocation2], %s217
          %s220 = ssub.s32 128, 128
          %221 = vsyncadd %s215, %s220
          %s222 = smul.addr %s22, 128
          %s223 = scalar_lea.hbm %s0, %s222
          %s225 = sshll.u32 %s218, 4
          %s226 = int_to_ptr.vmem [resolvable:$true] %s225
          %228 = dma.hbm_to_vmem [thread:$0]  %s223, 128, %s226, %s215
        $region28: #{tpu_custom_call.1} parent=23 // pred_fallthru
          _
      $region24: #{tpu_custom_call.1} parent=5 // pred_fallthru
        _
      %p229 = scmp.le.s32.totalorder 1, %s22
      %p230 = scmp.lt.s32.totalorder %s22, 3
      %p231 = pnand %p229, %p230
      %p232 = pneg %p231
      // Predicated region
      $region29: #{tpu_custom_call.1} parent=5 // pred_check
        _
      $region30: #{tpu_custom_call.1} parent=5 // pred_check_branch
        %234 = sbr.rel (%p231) target = $region32
      $region31: #{tpu_custom_call.1} parent=5 // pred_region
        %s235 = ssub.s32 %s22, 1
        %s236 = sand.u32 %s35, 1
        %s237 = scalar_lea.sflag [#allocation3], %s236
        %s238 = sand.u32 %s35, 1
        %s239 = smul.addr %s238, 8
        %s240 = scalar_lea.vmem [#allocation2], %s239
        // Predicated region
        $region33: #{tpu_custom_call.1} parent=31 // pred_check
          %p241 = pneg %p48
        $region34: #{tpu_custom_call.1} parent=31 // pred_check_branch
          %243 = sbr.rel (%p241) target = $region36
        $region35: #{tpu_custom_call.1} parent=31 // pred_region
          %244 = dma.done %s237, 128
        $region36: #{tpu_custom_call.1} parent=31 // pred_fallthru
          _
        // Predicated region
        $region37: #{tpu_custom_call.1} parent=31 // pred_check
          %p245 = pneg %p69
        $region38: #{tpu_custom_call.1} parent=31 // pred_check_branch
          %247 = sbr.rel (%p245) target = $region40
        $region39: #{tpu_custom_call.1} parent=31 // pred_region
          %248 = dma.done [#allocation6], 256
        $region40: #{tpu_custom_call.1} parent=31 // pred_fallthru
          _
        // Predicated region
        $region41: #{tpu_custom_call.1} parent=31 // pred_check
          %p249 = pneg %p90
        $region42: #{tpu_custom_call.1} parent=31 // pred_check_branch
          %251 = sbr.rel (%p249) target = $region44
        $region43: #{tpu_custom_call.1} parent=31 // pred_region
          %252 = dma.done [#allocation6], 16
        $region44: #{tpu_custom_call.1} parent=31 // pred_fallthru
          _
        %s253 = sand.u32 %s35, 1
        %s254 = scalar_lea.sflag [#allocation3], %s253
        %s255 = sand.u32 %s35, 1
        %s256 = smul.addr %s255, 8
        %s257 = scalar_lea.vmem [#allocation2], %s256
        %p258 = pneg %p48
        %p259 = pneg %p45
        %p260 = pneg %p69
        %p261 = pneg %p66
        %p262 = pneg %p90
        %p263 = pneg %p87
        %p264 = pneg %p116
        %p265 = pneg %p113
        %s266 = sand.u32 %s103, 1
        %s267 = scalar_lea.sflag [#allocation4], %s266
        %s268 = sand.u32 %s103, 1
        %s269 = smul.addr %s268, 4
        %s270 = scalar_lea.vmem [#allocation8], %s269
        %p271 = pneg %p142
        %p272 = pneg %p139
        %s273 = sand.u32 %s27, 1
        %s274 = scalar_lea.sflag [#allocation10], %s273
        %s275 = sand.u32 %s129, 1
        %s276 = smul.addr %s275, 4
        %s277 = scalar_lea.vmem [#allocation9], %s276
        %p278 = pneg %p168
        %p279 = pneg %p165
        %s280 = sand.u32 %s27, 1
        %s281 = scalar_lea.sflag [#allocation10], %s280
        %s282 = sand.u32 %s155, 1
        %s283 = smul.addr %s282, 4
        %s284 = scalar_lea.vmem [#allocation11], %s283
        %v286 = vld [vmem:[%s240] sm:$0xff]
        %v287 = vpack.c.bf16 %v286, %v286
        %v288 = vld [vmem:[#allocation5] sm:$0xf]
        %v289 = vld [vmem:[#allocation5 + $0x4] sm:$0xf]
        %v290 = vld [vmem:[#allocation5 + $0x8] sm:$0xf]
        %v291 = vld [vmem:[#allocation5 + $0xc] sm:$0xf]
        %v292 = vld [vmem:[#allocation7] sm:$0x1]
        %v294 = vlaneseq
        %v295 = vshrl.u32 %v294, 7
        %v296 = vsub.s32 0, %v295
        %v297 = vrot.slane %v292, %v296
        %v303 = vunpack.c.l.b16 %v288
        %v304 = vunpack.c.l.b16 %v289
        %v305 = vunpack.c.l.b16 %v290
        %v306 = vunpack.c.l.b16 %v291
        %v307 = vpack.c.b16 %v304, %v303
        %v308 = vpack.c.b16 %v306, %v305
        %vm311 = vcmask 261120
        %v313 = vsel %vm311, %v287, 0
        %315 = vmatprep.subr.bf16.mxu0 0
        %316 = vmatpush1.bf16.msra.mxu0 %v307
        %317 = vmatprep.subr.bf16.mxu0 0
        %318 = vmatpush1.bf16.msra.mxu0 %v308
        %319 = vmatprep.subr.bf16.mxu0 0
        %320 = vmatpush1.bf16.msra.mxu0 0
        %321 = vmatprep.subr.bf16.mxu0 0
        %322 = vmatpush1.bf16.msra.mxu0 0
        %323 = vmatprep.subr.bf16.mxu0 0
        %324 = vmatpush1.bf16.msra.mxu0 0
        %325 = vmatprep.subr.bf16.mxu0 0
        %326 = vmatpush1.bf16.msra.mxu0 0
        %327 = vmatprep.subr.bf16.mxu0 0
        %328 = vmatpush1.bf16.msra.mxu0 0
        %329 = vmatprep.subr.bf16.mxu0 0
        %330 = vmatpush1.bf16.msra.mxu0 0
        %331 = vmatprep.subr.bf16.mxu0 0
        %332 = vmatpush1.bf16.msra.mxu0 0
        %333 = vmatprep.subr.bf16.mxu0 0
        %334 = vmatpush1.bf16.msra.mxu0 0
        %335 = vmatprep.subr.bf16.mxu0 0
        %336 = vmatpush1.bf16.msra.mxu0 0
        %337 = vmatprep.subr.bf16.mxu0 0
        %338 = vmatpush1.bf16.msra.mxu0 0
        %339 = vmatprep.subr.bf16.mxu0 0
        %340 = vmatpush1.bf16.msra.mxu0 0
        %341 = vmatprep.subr.bf16.mxu0 0
        %342 = vmatpush1.bf16.msra.mxu0 0
        %343 = vmatprep.subr.bf16.mxu0 0
        %344 = vmatpush1.bf16.msra.mxu0 0
        %345 = vmatprep.subr.bf16.mxu0 0
        %346 = vmatpush1.bf16.msra.mxu0 0
        %347 = vmatprep.mubr.bf16.mxu0 0
        %348 = vmatmul.mubr.bf16.gmra.mrb[0].mxu0 %v313
        %v349 = vpop.f32.mrb[0].mxu0
        %v350 = vadd.f32 %v297, %v349
        %v351 = vpop.f32.mrb[0].mxu0
        %v352 = vpop.f32.mrb[0].mxu0
        %v353 = vpop.f32.mrb[0].mxu0
        %354 = vdwg.mxu0
        %v355 = vpack.c.bf16 %v350, %v350
        %vm356 = vcmask 257024
        %357 = vst.msk [vmem:[%s270] sm:$0xf] %vm356, %v355
        %v359 = vunpack.c.l.b16 %v355
        %v360 = vpack.c.b16 %v359, %v359
        %361 = vrot.lane.b32.xlu0 %v360, 96
        %v362 = vpop.permute.xlu0 %361
        %364 = vst.msk [vmem:[%s277] sm:$0xf] %vm356, %v362
        %365 = vrot.lane.b32.xlu0 %v360, 64
        %v366 = vpop.permute.xlu0 %365
        %368 = vst.msk [vmem:[%s284] sm:$0xf] %vm356, %v366
        %s369 = sand.u32 %s103, 1
        %s370 = scalar_lea.sflag [#allocation4], %s369
        %s371 = sand.u32 %s103, 1
        %s372 = smul.addr %s371, 4
        %s373 = scalar_lea.vmem [#allocation8], %s372
        %s374 = sand.u32 %s27, 1
        %s375 = scalar_lea.sflag [#allocation10], %s374
        %s376 = sand.u32 %s129, 1
        %s377 = smul.addr %s376, 4
        %s378 = scalar_lea.vmem [#allocation9], %s377
        %s379 = sand.u32 %s27, 1
        %s380 = scalar_lea.sflag [#allocation10], %s379
        %s381 = sand.u32 %s155, 1
        %s382 = smul.addr %s381, 4
        %s383 = scalar_lea.vmem [#allocation11], %s382
        // Predicated region
        $region45: #{tpu_custom_call.1} parent=31 // pred_check
          %p384 = pneg %p113
        $region46: #{tpu_custom_call.1} parent=31 // pred_check_branch
          %386 = sbr.rel (%p384) target = $region48
        $region47: #{tpu_custom_call.1} parent=31 // pred_region
          %s388 = ssub.s32 64, 64
          %389 = vsyncadd %s370, %s388
          %s390 = smul.addr %s27, 64
          %s391 = scalar_lea.hbm %s3, %s390
          %s393 = sshll.u32 %s373, 4
          %s394 = int_to_ptr.vmem [resolvable:$true] %s393
          %396 = dma.vmem_to_hbm [thread:$0]  %s394, 64, %s391, %s370
        $region48: #{tpu_custom_call.1} parent=31 // pred_fallthru
          _
        // Predicated region
        $region49: #{tpu_custom_call.1} parent=31 // pred_check
          %p397 = pneg %p139
        $region50: #{tpu_custom_call.1} parent=31 // pred_check_branch
          %399 = sbr.rel (%p397) target = $region52
        $region51: #{tpu_custom_call.1} parent=31 // pred_region
          %s401 = ssub.s32 64, 64
          %402 = vsyncadd %s375, %s401
          %s403 = smul.addr %s27, 64
          %s404 = scalar_lea.hbm %s4, %s403
          %s406 = sshll.u32 %s378, 4
          %s407 = int_to_ptr.vmem [resolvable:$true] %s406
          %409 = dma.vmem_to_hbm [thread:$0]  %s407, 64, %s404, %s375
        $region52: #{tpu_custom_call.1} parent=31 // pred_fallthru
          _
        // Predicated region
        $region53: #{tpu_custom_call.1} parent=31 // pred_check
          %p410 = pneg %p165
        $region54: #{tpu_custom_call.1} parent=31 // pred_check_branch
          %412 = sbr.rel (%p410) target = $region56
        $region55: #{tpu_custom_call.1} parent=31 // pred_region
          %s414 = ssub.s32 64, 64
          %415 = vsyncadd %s380, %s414
          %s416 = smul.addr %s27, 64
          %s417 = scalar_lea.hbm %s5, %s416
          %s419 = sshll.u32 %s383, 4
          %s420 = int_to_ptr.vmem [resolvable:$true] %s419
          %422 = dma.vmem_to_hbm [thread:$0]  %s420, 64, %s417, %s380
        $region56: #{tpu_custom_call.1} parent=31 // pred_fallthru
          _
      $region32: #{tpu_custom_call.1} parent=5 // pred_fallthru
        _
      %p423 = scmp.le.s32.totalorder 2, %s22
      // Predicated region
      $region57: #{tpu_custom_call.1} parent=5 // pred_check
        %p424 = pneg %p423
      $region58: #{tpu_custom_call.1} parent=5 // pred_check_branch
        %426 = sbr.rel (%p424) target = $region60
      $region59: #{tpu_custom_call.1} parent=5 // pred_region
        %s427 = ssub.s32 %s22, 2
        // Predicated region
        $region61: #{tpu_custom_call.1} parent=59 // pred_check
          %p428 = pneg %p119
        $region62: #{tpu_custom_call.1} parent=59 // pred_check_branch
          %430 = sbr.rel (%p428) target = $region64
        $region63: #{tpu_custom_call.1} parent=59 // pred_region
          %s431 = sand.u32 %s104, 1
          %s432 = scalar_lea.sflag [#allocation4], %s431
          %s433 = sand.u32 %s104, 1
          %s434 = smul.addr %s433, 4
          %s435 = scalar_lea.vmem [#allocation8], %s434
          %436 = dma.done %s432, 64
        $region64: #{tpu_custom_call.1} parent=59 // pred_fallthru
          _
        // Predicated region
        $region65: #{tpu_custom_call.1} parent=59 // pred_check
          %p437 = pneg %p145
        $region66: #{tpu_custom_call.1} parent=59 // pred_check_branch
          %439 = sbr.rel (%p437) target = $region68
        $region67: #{tpu_custom_call.1} parent=59 // pred_region
          %s440 = sand.u32 %s28, 1
          %s441 = scalar_lea.sflag [#allocation10], %s440
          %s442 = sand.u32 %s130, 1
          %s443 = smul.addr %s442, 4
          %s444 = scalar_lea.vmem [#allocation9], %s443
          %445 = dma.done %s441, 64
        $region68: #{tpu_custom_call.1} parent=59 // pred_fallthru
          _
        // Predicated region
        $region69: #{tpu_custom_call.1} parent=59 // pred_check
          %p446 = pneg %p171
        $region70: #{tpu_custom_call.1} parent=59 // pred_check_branch
          %448 = sbr.rel (%p446) target = $region72
        $region71: #{tpu_custom_call.1} parent=59 // pred_region
          %s449 = sand.u32 %s28, 1
          %s450 = scalar_lea.sflag [#allocation10], %s449
          %s451 = sand.u32 %s156, 1
          %s452 = smul.addr %s451, 4
          %s453 = scalar_lea.vmem [#allocation11], %s452
          %454 = dma.done %s450, 64
        $region72: #{tpu_custom_call.1} parent=59 // pred_fallthru
          _
      $region60: #{tpu_custom_call.1} parent=5 // pred_fallthru
        _
    $region6: #{tpu_custom_call.1} parent=1 // loop_footer
      %s26 = sadd.s32 1, %s22
    $region7: #{tpu_custom_call.1} parent=1 // loop_footer_branch
      %21 = sbr.rel target = $region3
    $region8: #{tpu_custom_call.1} parent=1 // loop_exit
      _
    %455 = vsyncpa [#allocation3], 1
    %s456 = scalar_lea.sflag [#allocation3], 1
    %457 = vsyncpa %s456, 1
    %458 = vsyncpa [#allocation6], 1
    %459 = vsyncpa [#allocation4], 1
    %s460 = scalar_lea.sflag [#allocation4], 1
    %461 = vsyncpa %s460, 1
    %462 = vsyncpa [#allocation10], 1
    %s463 = scalar_lea.sflag [#allocation10], 1
    %464 = vsyncpa %s463, 1

// kernel: tpu_custom_call.1
$region0: #{tpu_custom_call.1}
  #allocation0 [shape = 'u32[]', space=smem, size = 0x4, offset = 0x4, fixed_abs, tag = 'smem constant byte address 0x4 - core index']
  #allocation1 [shape = 'u32[144,128]{1,0:T(1,128)}', space=vmem, size = 0x12000, scoped, tag = 'internal scratch']
  %s0 = inlined_call_operand.hbm [shape: f32[16,32], index: 0, kind: input, shape index: {}]
  %s1 = inlined_call_operand.hbm [shape: bf16[32,96], index: 1, kind: input, shape index: {}]
  %s2 = inlined_call_operand.hbm [shape: f32[1,96], index: 2, kind: input, shape index: {}]
  %s3 = inlined_call_operand.hbm [shape: bf16[16,32], index: 3, kind: output, shape index: {0}]
  %s4 = inlined_call_operand.hbm [shape: bf16[16,32], index: 4, kind: output, shape index: {1}]
  %s5 = inlined_call_operand.hbm [shape: bf16[16,32], index: 5, kind: output, shape index: {2}]
  %6 = xla_tuple %s3, %s4, %s5
  %s7 = sld [smem:[#allocation0]]
  $region73: #{tpu_custom_call.1} parent=0
    _
  %s9 = ssub.s32 1, %s7
  %s10 = scalar_select 0, %s9, %s7
  $region1: #{tpu_custom_call.1} parent=0
    #allocation2 [shape = 'u8[8192]{0}', space=vmem, size = 0x2000, scoped, tag = 'input window, operand 0']
    #allocation3 [shape = 's32[2]{0}', space=sflag, size = 0x8, scoped, tag = 'scoped memory for tpu_custom_call.1']
    #allocation4 [shape = 's32[2]{0}', space=sflag, size = 0x8, scoped, tag = 'scoped memory for tpu_custom_call.1']
    #allocation5 [shape = 'u8[8192]{0}', space=vmem, size = 0x2000, scoped, tag = 'input window, operand 1, single buffered']
    #allocation6 [shape = 's32[1]{0}', space=sflag, size = 0x4, scoped, tag = 'scoped memory for tpu_custom_call.1']
    #allocation7 [shape = 'u8[512]{0}', space=vmem, size = 0x400, scoped, tag = 'input window, operand 2, single buffered']
    #allocation8 [shape = 'u8[4096]{0}', space=vmem, size = 0x1000, scoped, tag = 'output window, operand 0']
    #allocation9 [shape = 'u8[4096]{0}', space=vmem, size = 0x1000, scoped, tag = 'output window, operand 1']
    #allocation10 [shape = 's32[2]{0}', space=sflag, size = 0x8, scoped, tag = 'scoped memory for tpu_custom_call.1']
    #allocation11 [shape = 'u8[4096]{0}', space=vmem, size = 0x1000, scoped, tag = 'output window, operand 2']
    %11 = vsyncpa [#allocation3], 0
    %s12 = scalar_lea.sflag [#allocation3], 1
    %13 = vsyncpa %s12, 0
    %14 = vsyncpa [#allocation6], 0
    %15 = vsyncpa [#allocation4], 0
    %s16 = scalar_lea.sflag [#allocation4], 1
    %17 = vsyncpa %s16, 0
    %18 = vsyncpa [#allocation10], 0
    %s19 = scalar_lea.sflag [#allocation10], 1
    %20 = vsyncpa %s19, 0
    loop: start=0, step=1, limit=4
    $region2: #{tpu_custom_call.1} parent=1 // loop_pre_header
      _
    $region3: #{tpu_custom_call.1} parent=1 // loop_header
      %s22 = sphi 0, %s26
      %p23 = scmp.ge.s32.totalorder %s22, 4
      %s32 = sphi 0, %s34
      %s35 = sphi 0, %s32
      %s36 = sphi 0, %s35
      %s52 = sphi 0, %s36
      %s56 = sphi 0, %s56
      %s58 = sphi 0, %s56
      %s59 = sphi 0, %s58
      %s73 = sphi 0, %s59
      %s77 = sphi 0, %s77
      %s79 = sphi 0, %s77
      %s80 = sphi 0, %s79
      %s94 = sphi 0, %s80
      %s100 = sphi 0, %s102
      %s103 = sphi 0, %s100
      %s104 = sphi 0, %s103
      %s120 = sphi 0, %s104
      %s126 = sphi 0, %s128
      %s129 = sphi 0, %s126
      %s130 = sphi 0, %s129
      %s146 = sphi 0, %s130
      %s152 = sphi 0, %s154
      %s155 = sphi 0, %s152
      %s156 = sphi 0, %s155
      %s172 = sphi 0, %s156
    $region4: #{tpu_custom_call.1} parent=1 // loop_header_branch
      %25 = sbr.rel (%p23) target = $region8
    $region5: #{tpu_custom_call.1} parent=1 // loop_body
      %s27 = ssub.s32 %s22, 1
      %s28 = ssub.s32 %s22, 2
      %s29 = sadd.s32 %s22, 1
      %s30 = ssub.s32 %s22, %s29
      %p31 = scmp.eq.s32.totalorder %s30, 0
      %s33 = sadd.s32 %s32, 1
      %s34 = scalar_select %p31, %s32, %s33
      %p37 = pneg %p31
      %p38 = scmp.eq.s32.totalorder %s22, 1
      %p39 = por %p37, %p38
      %p40 = scmp.ne.s32.totalorder %s32, %s35
      %p41 = scmp.eq.s32.totalorder %s22, 0
      %p42 = por %p40, %p41
      %p43 = scmp.ne.s32.totalorder %s32, %s35
      %p44 = scmp.eq.s32.totalorder %s27, 1
      %p45 = por %p43, %p44
      %p46 = scmp.ne.s32.totalorder %s35, %s36
      %p47 = scmp.eq.s32.totalorder %s27, 0
      %p48 = por %p46, %p47
      %p49 = scmp.ne.s32.totalorder %s35, %s36
      %p50 = scmp.eq.s32.totalorder %s28, 1
      %p51 = por %p49, %p50
      %p53 = scmp.ne.s32.totalorder %s36, %s52
      %p54 = scmp.eq.s32.totalorder %s28, 0
      %p55 = por %p53, %p54
      %s57 = sadd.s32 %s56, 1
      %p60 = scmp.eq.s32.totalorder %s22, 1
      %p61 = scmp.ne.s32.totalorder %s56, %s58
      %p62 = scmp.eq.s32.totalorder %s22, 0
      %p63 = por %p61, %p62
      %p64 = scmp.ne.s32.totalorder %s56, %s58
      %p65 = scmp.eq.s32.totalorder %s27, 1
      %p66 = por %p64, %p65
      %p67 = scmp.ne.s32.totalorder %s58, %s59
      %p68 = scmp.eq.s32.totalorder %s27, 0
      %p69 = por %p67, %p68
      %p70 = scmp.ne.s32.totalorder %s58, %s59
      %p71 = scmp.eq.s32.totalorder %s28, 1
      %p72 = por %p70, %p71
      %p74 = scmp.ne.s32.totalorder %s59, %s73
      %p75 = scmp.eq.s32.totalorder %s28, 0
      %p76 = por %p74, %p75
      %s78 = sadd.s32 %s77, 1
      %p81 = scmp.eq.s32.totalorder %s22, 1
      %p82 = scmp.ne.s32.totalorder %s77, %s79
      %p83 = scmp.eq.s32.totalorder %s22, 0
      %p84 = por %p82, %p83
      %p85 = scmp.ne.s32.totalorder %s77, %s79
      %p86 = scmp.eq.s32.totalorder %s27, 1
      %p87 = por %p85, %p86
      %p88 = scmp.ne.s32.totalorder %s79, %s80
      %p89 = scmp.eq.s32.totalorder %s27, 0
      %p90 = por %p88, %p89
      %p91 = scmp.ne.s32.totalorder %s79, %s80
      %p92 = scmp.eq.s32.totalorder %s28, 1
      %p93 = por %p91, %p92
      %p95 = scmp.ne.s32.totalorder %s80, %s94
      %p96 = scmp.eq.s32.totalorder %s28, 0
      %p97 = por %p95, %p96
      %s98 = ssub.s32 %s22, %s29
      %p99 = scmp.eq.s32.totalorder %s98, 0
      %s101 = sadd.s32 %s100, 1
      %s102 = scalar_select %p99, %s100, %s101
      %p105 = pneg %p99
      %p106 = scmp.eq.s32.totalorder %s22, 1
      %p107 = por %p105, %p106
      %p108 = scmp.ne.s32.totalorder %s100, %s103
      %p109 = scmp.eq.s32.totalorder %s22, 0
      %p110 = por %p108, %p109
      %p111 = scmp.ne.s32.totalorder %s100, %s103
      %p112 = scmp.eq.s32.totalorder %s27, 1
      %p113 = por %p111, %p112
      %p114 = scmp.ne.s32.totalorder %s103, %s104
      %p115 = scmp.eq.s32.totalorder %s27, 0
      %p116 = por %p114, %p115
      %p117 = scmp.ne.s32.totalorder %s103, %s104
      %p118 = scmp.eq.s32.totalorder %s28, 1
      %p119 = por %p117, %p118
      %p121 = scmp.ne.s32.totalorder %s104, %s120
      %p122 = scmp.eq.s32.totalorder %s28, 0
      %p123 = por %p121, %p122
      %s124 = ssub.s32 %s22, %s29
      %p125 = scmp.eq.s32.totalorder %s124, 0
      %s127 = sadd.s32 %s126, 1
      %s128 = scalar_select %p125, %s126, %s127
      %p131 = pneg %p125
      %p132 = scmp.eq.s32.totalorder %s22, 1
      %p133 = por %p131, %p132
      %p134 = scmp.ne.s32.totalorder %s126, %s129
      %p135 = scmp.eq.s32.totalorder %s22, 0
      %p136 = por %p134, %p135
      %p137 = scmp.ne.s32.totalorder %s126, %s129
      %p138 = scmp.eq.s32.totalorder %s27, 1
      %p139 = por %p137, %p138
      %p140 = scmp.ne.s32.totalorder %s129, %s130
      %p141 = scmp.eq.s32.totalorder %s27, 0
      %p142 = por %p140, %p141
      %p143 = scmp.ne.s32.totalorder %s129, %s130
      %p144 = scmp.eq.s32.totalorder %s28, 1
      %p145 = por %p143, %p144
      %p147 = scmp.ne.s32.totalorder %s130, %s146
      %p148 = scmp.eq.s32.totalorder %s28, 0
      %p149 = por %p147, %p148
      %s150 = ssub.s32 %s22, %s29
      %p151 = scmp.eq.s32.totalorder %s150, 0
      %s153 = sadd.s32 %s152, 1
      %s154 = scalar_select %p151, %s152, %s153
      %p157 = pneg %p151
      %p158 = scmp.eq.s32.totalorder %s22, 1
      %p159 = por %p157, %p158
      %p160 = scmp.ne.s32.totalorder %s152, %s155
      %p161 = scmp.eq.s32.totalorder %s22, 0
      %p162 = por %p160, %p161
      %p163 = scmp.ne.s32.totalorder %s152, %s155
      %p164 = scmp.eq.s32.totalorder %s27, 1
      %p165 = por %p163, %p164
      %p166 = scmp.ne.s32.totalorder %s155, %s156
      %p167 = scmp.eq.s32.totalorder %s27, 0
      %p168 = por %p166, %p167
      %p169 = scmp.ne.s32.totalorder %s155, %s156
      %p170 = scmp.eq.s32.totalorder %s28, 1
      %p171 = por %p169, %p170
      %p173 = scmp.ne.s32.totalorder %s156, %s172
      %p174 = scmp.eq.s32.totalorder %s28, 0
      %p175 = por %p173, %p174
      %p176 = scmp.le.s32.totalorder 1, %s22
      %p177 = scmp.lt.s32.totalorder %s22, 3
      %p178 = pnand %p176, %p177
      %p179 = pneg %p178
      // Predicated region
      $region9: #{tpu_custom_call.1} parent=5 // pred_check
        _
      $region10: #{tpu_custom_call.1} parent=5 // pred_check_branch
        %181 = sbr.rel (%p178) target = $region12
      $region11: #{tpu_custom_call.1} parent=5 // pred_region
        %s182 = ssub.s32 %s22, 1
        // Predicated region
        $region13: #{tpu_custom_call.1} parent=11 // pred_check
          %p183 = pneg %p69
        $region14: #{tpu_custom_call.1} parent=11 // pred_check_branch
          %185 = sbr.rel (%p183) target = $region16
        $region15: #{tpu_custom_call.1} parent=11 // pred_region
          %s187 = ssub.s32 256, 256
          %188 = vsyncadd [#allocation6], %s187
          %s189 = sshll.u32 [#allocation5], 4
          %s190 = int_to_ptr.vmem [resolvable:$true] %s189
          %195 = dma.hbm_to_vmem [thread:$0]  %s1, 256, %s190, [#allocation6], 64, 64, 4
        $region16: #{tpu_custom_call.1} parent=11 // pred_fallthru
          _
        // Predicated region
        $region17: #{tpu_custom_call.1} parent=11 // pred_check
          %p196 = pneg %p90
        $region18: #{tpu_custom_call.1} parent=11 // pred_check_branch
          %198 = sbr.rel (%p196) target = $region20
        $region19: #{tpu_custom_call.1} parent=11 // pred_region
          %s200 = ssub.s32 16, 16
          %201 = vsyncadd [#allocation6], %s200
          %s203 = sshll.u32 [#allocation7], 4
          %s204 = int_to_ptr.vmem [resolvable:$true] %s203
          %206 = dma.hbm_to_vmem [thread:$0]  %s2, 16, %s204, [#allocation6]
        $region20: #{tpu_custom_call.1} parent=11 // pred_fallthru
          _
      $region12: #{tpu_custom_call.1} parent=5 // pred_fallthru
        _
      %p207 = scmp.lt.s32.totalorder %s22, 2
      // Predicated region
      $region21: #{tpu_custom_call.1} parent=5 // pred_check
        %p208 = pneg %p207
      $region22: #{tpu_custom_call.1} parent=5 // pred_check_branch
        %210 = sbr.rel (%p208) target = $region24
      $region23: #{tpu_custom_call.1} parent=5 // pred_region
        // Predicated region
        $region25: #{tpu_custom_call.1} parent=23 // pred_check
          %p211 = pneg %p42
        $region26: #{tpu_custom_call.1} parent=23 // pred_check_branch
          %213 = sbr.rel (%p211) target = $region28
        $region27: #{tpu_custom_call.1} parent=23 // pred_region
          %s214 = sand.u32 %s32, 1
          %s215 = scalar_lea.sflag [#allocation3], %s214
          %s216 = sand.u32 %s32, 1
          %s217 = smul.addr %s216, 8
          %s218 = scalar_lea.vmem [#allocation2], %s217
          %s220 = ssub.s32 128, 128
          %221 = vsyncadd %s215, %s220
          %s222 = smul.addr %s22, 128
          %s223 = scalar_lea.hbm %s0, %s222
          %s225 = sshll.u32 %s218, 4
          %s226 = int_to_ptr.vmem [resolvable:$true] %s225
          %228 = dma.hbm_to_vmem [thread:$0]  %s223, 128, %s226, %s215
        $region28: #{tpu_custom_call.1} parent=23 // pred_fallthru
          _
      $region24: #{tpu_custom_call.1} parent=5 // pred_fallthru
        _
      %p229 = scmp.le.s32.totalorder 1, %s22
      %p230 = scmp.lt.s32.totalorder %s22, 3
      %p231 = pnand %p229, %p230
      %p232 = pneg %p231
      // Predicated region
      $region29: #{tpu_custom_call.1} parent=5 // pred_check
        _
      $region30: #{tpu_custom_call.1} parent=5 // pred_check_branch
        %234 = sbr.rel (%p231) target = $region32
      $region31: #{tpu_custom_call.1} parent=5 // pred_region
        %s235 = ssub.s32 %s22, 1
        %s236 = sand.u32 %s35, 1
        %s237 = scalar_lea.sflag [#allocation3], %s236
        %s238 = sand.u32 %s35, 1
        %s239 = smul.addr %s238, 8
        %s240 = scalar_lea.vmem [#allocation2], %s239
        // Predicated region
        $region33: #{tpu_custom_call.1} parent=31 // pred_check
          %p241 = pneg %p48
        $region34: #{tpu_custom_call.1} parent=31 // pred_check_branch
          %243 = sbr.rel (%p241) target = $region36
        $region35: #{tpu_custom_call.1} parent=31 // pred_region
          %244 = dma.done %s237, 128
        $region36: #{tpu_custom_call.1} parent=31 // pred_fallthru
          _
        // Predicated region
        $region37: #{tpu_custom_call.1} parent=31 // pred_check
          %p245 = pneg %p69
        $region38: #{tpu_custom_call.1} parent=31 // pred_check_branch
          %247 = sbr.rel (%p245) target = $region40
        $region39: #{tpu_custom_call.1} parent=31 // pred_region
          %248 = dma.done [#allocation6], 256
        $region40: #{tpu_custom_call.1} parent=31 // pred_fallthru
          _
        // Predicated region
        $region41: #{tpu_custom_call.1} parent=31 // pred_check
          %p249 = pneg %p90
        $region42: #{tpu_custom_call.1} parent=31 // pred_check_branch
          %251 = sbr.rel (%p249) target = $region44
        $region43: #{tpu_custom_call.1} parent=31 // pred_region
          %252 = dma.done [#allocation6], 16
        $region44: #{tpu_custom_call.1} parent=31 // pred_fallthru
          _
        %s253 = sand.u32 %s35, 1
        %s254 = scalar_lea.sflag [#allocation3], %s253
        %s255 = sand.u32 %s35, 1
        %s256 = smul.addr %s255, 8
        %s257 = scalar_lea.vmem [#allocation2], %s256
        %p258 = pneg %p48
        %p259 = pneg %p45
        %p260 = pneg %p69
        %p261 = pneg %p66
        %p262 = pneg %p90
        %p263 = pneg %p87
        %p264 = pneg %p116
        %p265 = pneg %p113
        %s266 = sand.u32 %s103, 1
        %s267 = scalar_lea.sflag [#allocation4], %s266
        %s268 = sand.u32 %s103, 1
        %s269 = smul.addr %s268, 4
        %s270 = scalar_lea.vmem [#allocation8], %s269
        %p271 = pneg %p142
        %p272 = pneg %p139
        %s273 = sand.u32 %s27, 1
        %s274 = scalar_lea.sflag [#allocation10], %s273
        %s275 = sand.u32 %s129, 1
        %s276 = smul.addr %s275, 4
        %s277 = scalar_lea.vmem [#allocation9], %s276
        %p278 = pneg %p168
        %p279 = pneg %p165
        %s280 = sand.u32 %s27, 1
        %s281 = scalar_lea.sflag [#allocation10], %s280
        %s282 = sand.u32 %s155, 1
        %s283 = smul.addr %s282, 4
        %s284 = scalar_lea.vmem [#allocation11], %s283
        %v286 = vld [vmem:[%s240] sm:$0xff]
        %v287 = vpack.c.bf16 %v286, %v286
        %v288 = vld [vmem:[#allocation5] sm:$0xf]
        %v289 = vld [vmem:[#allocation5 + $0x4] sm:$0xf]
        %v290 = vld [vmem:[#allocation5 + $0x8] sm:$0xf]
        %v291 = vld [vmem:[#allocation5 + $0xc] sm:$0xf]
        %v292 = vld [vmem:[#allocation7] sm:$0x1]
        %v294 = vlaneseq
        %v295 = vshrl.u32 %v294, 7
        %v296 = vsub.s32 0, %v295
        %v297 = vrot.slane %v292, %v296
        %v303 = vunpack.c.l.b16 %v288
        %v304 = vunpack.c.l.b16 %v289
        %v305 = vunpack.c.l.b16 %v290
        %v306 = vunpack.c.l.b16 %v291
        %v307 = vpack.c.b16 %v304, %v303
        %v308 = vpack.c.b16 %v306, %v305
        %vm311 = vcmask 261120
        %v313 = vsel %vm311, %v287, 0
        %315 = vmatprep.subr.bf16.mxu0 0
        %316 = vmatpush1.bf16.msra.mxu0 %v307
        %317 = vmatprep.subr.bf16.mxu0 0
        %318 = vmatpush1.bf16.msra.mxu0 %v308
        %319 = vmatprep.subr.bf16.mxu0 0
        %320 = vmatpush1.bf16.msra.mxu0 0
        %321 = vmatprep.subr.bf16.mxu0 0
        %322 = vmatpush1.bf16.msra.mxu0 0
        %323 = vmatprep.subr.bf16.mxu0 0
        %324 = vmatpush1.bf16.msra.mxu0 0
        %325 = vmatprep.subr.bf16.mxu0 0
        %326 = vmatpush1.bf16.msra.mxu0 0
        %327 = vmatprep.subr.bf16.mxu0 0
        %328 = vmatpush1.bf16.msra.mxu0 0
        %329 = vmatprep.subr.bf16.mxu0 0
        %330 = vmatpush1.bf16.msra.mxu0 0
        %331 = vmatprep.subr.bf16.mxu0 0
        %332 = vmatpush1.bf16.msra.mxu0 0
        %333 = vmatprep.subr.bf16.mxu0 0
        %334 = vmatpush1.bf16.msra.mxu0 0
        %335 = vmatprep.subr.bf16.mxu0 0
        %336 = vmatpush1.bf16.msra.mxu0 0
        %337 = vmatprep.subr.bf16.mxu0 0
        %338 = vmatpush1.bf16.msra.mxu0 0
        %339 = vmatprep.subr.bf16.mxu0 0
        %340 = vmatpush1.bf16.msra.mxu0 0
        %341 = vmatprep.subr.bf16.mxu0 0
        %342 = vmatpush1.bf16.msra.mxu0 0
        %343 = vmatprep.subr.bf16.mxu0 0
        %344 = vmatpush1.bf16.msra.mxu0 0
        %345 = vmatprep.subr.bf16.mxu0 0
        %346 = vmatpush1.bf16.msra.mxu0 0
        %347 = vmatprep.mubr.bf16.mxu0 0
        %348 = vmatmul.mubr.bf16.gmra.mrb[0].mxu0 %v313
        %v349 = vpop.f32.mrb[0].mxu0
        %v350 = vadd.f32 %v297, %v349
        %v351 = vpop.f32.mrb[0].mxu0
        %v352 = vpop.f32.mrb[0].mxu0
        %v353 = vpop.f32.mrb[0].mxu0
        %354 = vdwg.mxu0
        %v355 = vpack.c.bf16 %v350, %v350
        %vm356 = vcmask 257024
        %357 = vst.msk [vmem:[%s270] sm:$0xf] %vm356, %v355
        %v359 = vunpack.c.l.b16 %v355
        %v360 = vpack.c.b16 %v359, %v359
        %361 = vrot.lane.b32.xlu0 %v360, 96
        %v362 = vpop.permute.xlu0 %361
        %364 = vst.msk [vmem:[%s277] sm:$0xf] %vm356, %v362
        %365 = vrot.lane.b32.xlu0 %v360, 64
        %v366 = vpop.permute.xlu0 %365
        %368 = vst.msk [vmem:[%s284] sm:$0xf] %vm356, %v366
        %s369 = sand.u32 %s103, 1
        %s370 = scalar_lea.sflag [#allocation4], %s369
        %s371 = sand.u32 %s103, 1
        %s372 = smul.addr %s371, 4
        %s373 = scalar_lea.vmem [#allocation8], %s372
        %s374 = sand.u32 %s27, 1
        %s375 = scalar_lea.sflag [#allocation10], %s374
        %s376 = sand.u32 %s129, 1
        %s377 = smul.addr %s376, 4
        %s378 = scalar_lea.vmem [#allocation9], %s377
        %s379 = sand.u32 %s27, 1
        %s380 = scalar_lea.sflag [#allocation10], %s379
        %s381 = sand.u32 %s155, 1
        %s382 = smul.addr %s381, 4
        %s383 = scalar_lea.vmem [#allocation11], %s382
        // Predicated region
        $region45: #{tpu_custom_call.1} parent=31 // pred_check
          %p384 = pneg %p113
        $region46: #{tpu_custom_call.1} parent=31 // pred_check_branch
          %386 = sbr.rel (%p384) target = $region48
        $region47: #{tpu_custom_call.1} parent=31 // pred_region
          %s388 = ssub.s32 64, 64
          %389 = vsyncadd %s370, %s388
          %s390 = smul.addr %s27, 64
          %s391 = scalar_lea.hbm %s3, %s390
          %s393 = sshll.u32 %s373, 4
          %s394 = int_to_ptr.vmem [resolvable:$true] %s393
          %396 = dma.vmem_to_hbm [thread:$0]  %s394, 64, %s391, %s370
        $region48: #{tpu_custom_call.1} parent=31 // pred_fallthru
          _
        // Predicated region
        $region49: #{tpu_custom_call.1} parent=31 // pred_check
          %p397 = pneg %p139
        $region50: #{tpu_custom_call.1} parent=31 // pred_check_branch
          %399 = sbr.rel (%p397) target = $region52
        $region51: #{tpu_custom_call.1} parent=31 // pred_region
          %s401 = ssub.s32 64, 64
          %402 = vsyncadd %s375, %s401
          %s403 = smul.addr %s27, 64
          %s404 = scalar_lea.hbm %s4, %s403
          %s406 = sshll.u32 %s378, 4
          %s407 = int_to_ptr.vmem [resolvable:$true] %s406
          %409 = dma.vmem_to_hbm [thread:$0]  %s407, 64, %s404, %s375
        $region52: #{tpu_custom_call.1} parent=31 // pred_fallthru
          _
        // Predicated region
        $region53: #{tpu_custom_call.1} parent=31 // pred_check
          %p410 = pneg %p165
        $region54: #{tpu_custom_call.1} parent=31 // pred_check_branch
          %412 = sbr.rel (%p410) target = $region56
        $region55: #{tpu_custom_call.1} parent=31 // pred_region
          %s414 = ssub.s32 64, 64
          %415 = vsyncadd %s380, %s414
          %s416 = smul.addr %s27, 64
          %s417 = scalar_lea.hbm %s5, %s416
          %s419 = sshll.u32 %s383, 4
          %s420 = int_to_ptr.vmem [resolvable:$true] %s419
          %422 = dma.vmem_to_hbm [thread:$0]  %s420, 64, %s417, %s380
        $region56: #{tpu_custom_call.1} parent=31 // pred_fallthru
          _
      $region32: #{tpu_custom_call.1} parent=5 // pred_fallthru
        _
      %p423 = scmp.le.s32.totalorder 2, %s22
      // Predicated region
      $region57: #{tpu_custom_call.1} parent=5 // pred_check
        %p424 = pneg %p423
      $region58: #{tpu_custom_call.1} parent=5 // pred_check_branch
        %426 = sbr.rel (%p424) target = $region60
      $region59: #{tpu_custom_call.1} parent=5 // pred_region
        %s427 = ssub.s32 %s22, 2
        // Predicated region
        $region61: #{tpu_custom_call.1} parent=59 // pred_check
          %p428 = pneg %p119
        $region62: #{tpu_custom_call.1} parent=59 // pred_check_branch
          %430 = sbr.rel (%p428) target = $region64
        $region63: #{tpu_custom_call.1} parent=59 // pred_region
          %s431 = sand.u32 %s104, 1
          %s432 = scalar_lea.sflag [#allocation4], %s431
          %s433 = sand.u32 %s104, 1
          %s434 = smul.addr %s433, 4
          %s435 = scalar_lea.vmem [#allocation8], %s434
          %436 = dma.done %s432, 64
        $region64: #{tpu_custom_call.1} parent=59 // pred_fallthru
          _
        // Predicated region
        $region65: #{tpu_custom_call.1} parent=59 // pred_check
          %p437 = pneg %p145
        $region66: #{tpu_custom_call.1} parent=59 // pred_check_branch
          %439 = sbr.rel (%p437) target = $region68
        $region67: #{tpu_custom_call.1} parent=59 // pred_region
          %s440 = sand.u32 %s28, 1
          %s441 = scalar_lea.sflag [#allocation10], %s440
          %s442 = sand.u32 %s130, 1
          %s443 = smul.addr %s442, 4
          %s444 = scalar_lea.vmem [#allocation9], %s443
          %445 = dma.done %s441, 64
        $region68: #{tpu_custom_call.1} parent=59 // pred_fallthru
          _
        // Predicated region
        $region69: #{tpu_custom_call.1} parent=59 // pred_check
          %p446 = pneg %p171
        $region70: #{tpu_custom_call.1} parent=59 // pred_check_branch
          %448 = sbr.rel (%p446) target = $region72
        $region71: #{tpu_custom_call.1} parent=59 // pred_region
          %s449 = sand.u32 %s28, 1
          %s450 = scalar_lea.sflag [#allocation10], %s449
          %s451 = sand.u32 %s156, 1
          %s452 = smul.addr %s451, 4
          %s453 = scalar_lea.vmem [#allocation11], %s452
          %454 = dma.done %s450, 64
        $region72: #{tpu_custom_call.1} parent=59 // pred_fallthru
          _
      $region60: #{tpu_custom_call.1} parent=5 // pred_fallthru
        _
    $region6: #{tpu_custom_call.1} parent=1 // loop_footer
      %s26 = sadd.s32 1, %s22
    $region7: #{tpu_custom_call.1} parent=1 // loop_footer_branch
      %21 = sbr.rel target = $region3
    $region8: #{tpu_custom_call.1} parent=1 // loop_exit
      _
    %455 = vsyncpa [#allocation3], 1
    %s456 = scalar_lea.sflag [#allocation3], 1
    %457 = vsyncpa %s456, 1
    %458 = vsyncpa [#allocation6], 1
    %459 = vsyncpa [#allocation4], 1
    %s460 = scalar_lea.sflag [#allocation4], 1
    %461 = vsyncpa %s460, 1
    %462 = vsyncpa [#allocation10], 1
    %s463 = scalar_lea.sflag [#allocation10], 1
    %464 = vsyncpa %s463, 1

</llo_original>
